<compile_context>
chip_gen: v5e
topology: v5e:2x2
jax: 0.10.0
libtpu: 0.0.40
codegen_flags: <defaults>
</compile_context>

<pallas_src>
import jax
import jax.numpy as jnp
from jax.experimental import pallas as pl
from jax.experimental.pallas import tpu as pltpu


def _sigmoid(z):
    # One EUP op (tanh) + cheap VPU affine, instead of exp + divide.
    return 0.5 * jnp.tanh(0.5 * z) + 0.5


def _mlp_kernel(x_ref,
                w1_ref, b1_ref,
                w2_ref, b2_ref,
                w3_ref, b3_ref,
                w4_ref, b4_ref,
                w5_ref, b5_ref,
                o_ref):
    f32 = jnp.float32
    x = x_ref[...]                                                   # [8, T]

    # fc1 + relu   (dropout p=0.2 -> identity in eval)
    h = jnp.dot(w1_ref[...], x, preferred_element_type=f32) + b1_ref[...]
    h = jnp.maximum(h, 0.0)                                          # [96, T]

    # fc2 + relu
    h = jnp.dot(w2_ref[...], h, preferred_element_type=f32) + b2_ref[...]
    h = jnp.maximum(h, 0.0)                                          # [64, T]

    # fc3 + sigmoid
    h = _sigmoid(jnp.dot(w3_ref[...], h, preferred_element_type=f32) + b3_ref[...])   # [32, T]

    # fc4 + sigmoid
    h = _sigmoid(jnp.dot(w4_ref[...], h, preferred_element_type=f32) + b4_ref[...])   # [16, T]

    # fc5 + sigmoid  -> lane-dense [1, T]
    h = _sigmoid(jnp.dot(w5_ref[...], h, preferred_element_type=f32) + b5_ref[...])   # [1, T]

    o_ref[...] = h.astype(o_ref.dtype)


def _round_up(n, m):
    return ((n + m - 1) // m) * m


def net_forward(x, params):
    """x: [B, 7] float32.  Returns [B] float32 (matches x.view(-1))."""
    B = x.shape[0]
    (w1, b1), (w2, b2), (w3, b3), (w4, b4), (w5, b5) = params

    TILE_B = min(2048, _round_up(max(B, 1), 128))
    B_pad = _round_up(B, TILE_B)
    n_tiles = B_pad // TILE_B

    # Feature-major, zero-padded input: [8, B_pad].
    x_t = jnp.zeros((8, B_pad), jnp.float32).at[:7, :B].set(x.T.astype(jnp.float32))

    # Full-extent, grid-invariant operands (weights / biases, VMEM-resident).
    const = lambda a: pl.BlockSpec(a.shape, lambda i: (0, 0))

    flops = 2 * B_pad * (8 * 96 + 96 * 64 + 64 * 32 + 32 * 16 + 16 * 1)
    transcendentals = B_pad * (32 + 16 + 1)
    param_bytes = sum(int(a.size) * 4 for p in params for a in p)
    bytes_accessed = B_pad * (8 + 1) * 4 + param_bytes

    out = pl.pallas_call(
        _mlp_kernel,
        out_shape=jax.ShapeDtypeStruct((1, B_pad), jnp.float32),
        grid=(n_tiles,),
        in_specs=[pl.BlockSpec((8, TILE_B), lambda i: (0, i)),
                  const(w1), const(b1),
                  const(w2), const(b2),
                  const(w3), const(b3),
                  const(w4), const(b4),
                  const(w5), const(b5)],
        out_specs=pl.BlockSpec((1, TILE_B), lambda i: (0, i)),
        compiler_params=pltpu.CompilerParams(
            dimension_semantics=("parallel",)),
        cost_estimate=pl.CostEstimate(
            flops=flops,
            transcendentals=transcendentals,
            bytes_accessed=bytes_accessed),
    )(x_t, w1, b1, w2, b2, w3, b3, w4, b4, w5, b5)

    return out[0, :B]                                               # x.view(-1)


def init_params(key):
    """Deterministic init. Weights stored [out, in] (fc1 padded to in=8); biases [out, 1]."""
    sizes = [(7, 96), (96, 64), (64, 32), (32, 16), (16, 1)]
    params = []
    for (fan_in, fan_out) in sizes:
        key, kw, kb = jax.random.split(key, 3)
        bound = 1.0 / float(fan_in) ** 0.5                          # PyTorch default range
        w = jax.random.uniform(kw, (fan_out, fan_in), jnp.float32, -bound, bound)
        if fan_in == 7:                                             # zero-pad fc1 K: 7 -> 8
            w = jnp.pad(w, ((0, 0), (0, 1)))
        b = jax.random.uniform(kb, (fan_out, 1), jnp.float32, -bound, bound)
        params.append((w, b))
    return params


def reference_forward(x, params):
    (w1, b1), (w2, b2), (w3, b3), (w4, b4), (w5, b5) = params
    h = jnp.maximum(x @ w1[:, :7].T + b1[:, 0], 0.0)
    h = jnp.maximum(h @ w2.T + b2[:, 0], 0.0)
    h = jax.nn.sigmoid(h @ w3.T + b3[:, 0])
    h = jax.nn.sigmoid(h @ w4.T + b4[:, 0])
    h = jax.nn.sigmoid(h @ w5.T + b5[:, 0])
    return h.reshape(-1)


if __name__ == "__main__":
    key = jax.random.PRNGKey(0)
    kx, kp = jax.random.split(key)

    B = 8
    x = jax.random.normal(kx, (B, 7), jnp.float32)
    params = init_params(kp)

    y = net_forward(x, params)
    jax.block_until_ready(y)

    y_ref = reference_forward(x, params)
    assert y.shape == (B,), y.shape
    assert jnp.allclose(y, y_ref, atol=1e-5, rtol=1e-5), (y, y_ref)

    print("KERNEL_OK")
</pallas_src>

<mosaic_0001>
module attributes {stable_mosaic.version = 11 : i64} {
  func.func @_mlp_kernel(%arg0: i32, %arg1: memref<8x128xf32, #tpu.memory_space<vmem>>, %arg2: memref<96x8xf32, #tpu.memory_space<vmem>>, %arg3: memref<96x1xf32, #tpu.memory_space<vmem>>, %arg4: memref<64x96xf32, #tpu.memory_space<vmem>>, %arg5: memref<64x1xf32, #tpu.memory_space<vmem>>, %arg6: memref<32x64xf32, #tpu.memory_space<vmem>>, %arg7: memref<32x1xf32, #tpu.memory_space<vmem>>, %arg8: memref<16x32xf32, #tpu.memory_space<vmem>>, %arg9: memref<16x1xf32, #tpu.memory_space<vmem>>, %arg10: memref<1x16xf32, #tpu.memory_space<vmem>>, %arg11: memref<1x1xf32, #tpu.memory_space<vmem>>, %arg12: memref<1x128xf32, #tpu.memory_space<vmem>>) attributes {dimension_semantics = [#tpu.dimension_semantics<parallel>], iteration_bounds = array<i64: 1>, scalar_prefetch = 0 : i64, scratch_operands = 0 : i64, tpu.core_type = #tpu.core_type<tc>, window_params = [{transform_indices = @transform_0, window_bounds = array<i64: 8, 128>}, {pipeline_mode = #tpu.pipeline_mode<synchronous>, transform_indices = @transform_1, window_bounds = array<i64: 96, 8>}, {pipeline_mode = #tpu.pipeline_mode<synchronous>, transform_indices = @transform_2, window_bounds = array<i64: 96, 1>}, {pipeline_mode = #tpu.pipeline_mode<synchronous>, transform_indices = @transform_3, window_bounds = array<i64: 64, 96>}, {pipeline_mode = #tpu.pipeline_mode<synchronous>, transform_indices = @transform_4, window_bounds = array<i64: 64, 1>}, {pipeline_mode = #tpu.pipeline_mode<synchronous>, transform_indices = @transform_5, window_bounds = array<i64: 32, 64>}, {pipeline_mode = #tpu.pipeline_mode<synchronous>, transform_indices = @transform_6, window_bounds = array<i64: 32, 1>}, {pipeline_mode = #tpu.pipeline_mode<synchronous>, transform_indices = @transform_7, window_bounds = array<i64: 16, 32>}, {pipeline_mode = #tpu.pipeline_mode<synchronous>, transform_indices = @transform_8, window_bounds = array<i64: 16, 1>}, {pipeline_mode = #tpu.pipeline_mode<synchronous>, transform_indices = @transform_9, window_bounds = array<i64: 1, 16>}, {pipeline_mode = #tpu.pipeline_mode<synchronous>, transform_indices = @transform_10, window_bounds = array<i64: 1, 1>}, {transform_indices = @transform_11, window_bounds = array<i64: 1, 128>}]} {
    %c0 = arith.constant 0 : index
    %c0_0 = arith.constant 0 : index
    %0 = vector.load %arg1[%c0, %c0_0] : memref<8x128xf32, #tpu.memory_space<vmem>>, vector<8x128xf32>
    %c0_1 = arith.constant 0 : index
    %c0_2 = arith.constant 0 : index
    %1 = vector.load %arg2[%c0_1, %c0_2] : memref<96x8xf32, #tpu.memory_space<vmem>>, vector<96x8xf32>
    %cst = arith.constant dense<0.000000e+00> : vector<96x128xf32>
    %2 = tpu.matmul %1, %0, %cst {dimension_numbers = #tpu.dot_dimension_numbers<[1], [0], [0], [1], [0, 0, 1, 1], [], []>} : vector<96x8xf32>, vector<8x128xf32>, vector<96x128xf32> -> vector<96x128xf32>
    %c0_3 = arith.constant 0 : index
    %c0_4 = arith.constant 0 : index
    %3 = vector.load %arg3[%c0_3, %c0_4] : memref<96x1xf32, #tpu.memory_space<vmem>>, vector<96x1xf32>
    %4 = vector.broadcast %3 : vector<96x1xf32> to vector<96x128xf32>
    %5 = arith.addf %2, %4 : vector<96x128xf32>
    %cst_5 = arith.constant 0.000000e+00 : f32
    %6 = vector.broadcast %cst_5 : f32 to vector<96x128xf32>
    %7 = arith.maximumf %5, %6 : vector<96x128xf32>
    %c0_6 = arith.constant 0 : index
    %c0_7 = arith.constant 0 : index
    %8 = vector.load %arg4[%c0_6, %c0_7] : memref<64x96xf32, #tpu.memory_space<vmem>>, vector<64x96xf32>
    %cst_8 = arith.constant dense<0.000000e+00> : vector<64x128xf32>
    %9 = tpu.matmul %8, %7, %cst_8 {dimension_numbers = #tpu.dot_dimension_numbers<[1], [0], [0], [1], [0, 0, 1, 1], [], []>} : vector<64x96xf32>, vector<96x128xf32>, vector<64x128xf32> -> vector<64x128xf32>
    %c0_9 = arith.constant 0 : index
    %c0_10 = arith.constant 0 : index
    %10 = vector.load %arg5[%c0_9, %c0_10] : memref<64x1xf32, #tpu.memory_space<vmem>>, vector<64x1xf32>
    %11 = vector.broadcast %10 : vector<64x1xf32> to vector<64x128xf32>
    %12 = arith.addf %9, %11 : vector<64x128xf32>
    %cst_11 = arith.constant 0.000000e+00 : f32
    %13 = vector.broadcast %cst_11 : f32 to vector<64x128xf32>
    %14 = arith.maximumf %12, %13 : vector<64x128xf32>
    %c0_12 = arith.constant 0 : index
    %c0_13 = arith.constant 0 : index
    %15 = vector.load %arg6[%c0_12, %c0_13] : memref<32x64xf32, #tpu.memory_space<vmem>>, vector<32x64xf32>
    %cst_14 = arith.constant dense<0.000000e+00> : vector<32x128xf32>
    %16 = tpu.matmul %15, %14, %cst_14 {dimension_numbers = #tpu.dot_dimension_numbers<[1], [0], [0], [1], [0, 0, 1, 1], [], []>} : vector<32x64xf32>, vector<64x128xf32>, vector<32x128xf32> -> vector<32x128xf32>
    %c0_15 = arith.constant 0 : index
    %c0_16 = arith.constant 0 : index
    %17 = vector.load %arg7[%c0_15, %c0_16] : memref<32x1xf32, #tpu.memory_space<vmem>>, vector<32x1xf32>
    %18 = vector.broadcast %17 : vector<32x1xf32> to vector<32x128xf32>
    %19 = arith.addf %16, %18 : vector<32x128xf32>
    %cst_17 = arith.constant 5.000000e-01 : f32
    %20 = vector.broadcast %cst_17 : f32 to vector<32x128xf32>
    %21 = arith.mulf %20, %19 : vector<32x128xf32>
    %22 = math.tanh %21 : vector<32x128xf32>
    %cst_18 = arith.constant 5.000000e-01 : f32
    %23 = vector.broadcast %cst_18 : f32 to vector<32x128xf32>
    %24 = arith.mulf %23, %22 : vector<32x128xf32>
    %cst_19 = arith.constant 5.000000e-01 : f32
    %25 = vector.broadcast %cst_19 : f32 to vector<32x128xf32>
    %26 = arith.addf %24, %25 : vector<32x128xf32>
    %c0_20 = arith.constant 0 : index
    %c0_21 = arith.constant 0 : index
    %27 = vector.load %arg8[%c0_20, %c0_21] : memref<16x32xf32, #tpu.memory_space<vmem>>, vector<16x32xf32>
    %cst_22 = arith.constant dense<0.000000e+00> : vector<16x128xf32>
    %28 = tpu.matmul %27, %26, %cst_22 {dimension_numbers = #tpu.dot_dimension_numbers<[1], [0], [0], [1], [0, 0, 1, 1], [], []>} : vector<16x32xf32>, vector<32x128xf32>, vector<16x128xf32> -> vector<16x128xf32>
    %c0_23 = arith.constant 0 : index
    %c0_24 = arith.constant 0 : index
    %29 = vector.load %arg9[%c0_23, %c0_24] : memref<16x1xf32, #tpu.memory_space<vmem>>, vector<16x1xf32>
    %30 = vector.broadcast %29 : vector<16x1xf32> to vector<16x128xf32>
    %31 = arith.addf %28, %30 : vector<16x128xf32>
    %cst_25 = arith.constant 5.000000e-01 : f32
    %32 = vector.broadcast %cst_25 : f32 to vector<16x128xf32>
    %33 = arith.mulf %32, %31 : vector<16x128xf32>
    %34 = math.tanh %33 : vector<16x128xf32>
    %cst_26 = arith.constant 5.000000e-01 : f32
    %35 = vector.broadcast %cst_26 : f32 to vector<16x128xf32>
    %36 = arith.mulf %35, %34 : vector<16x128xf32>
    %cst_27 = arith.constant 5.000000e-01 : f32
    %37 = vector.broadcast %cst_27 : f32 to vector<16x128xf32>
    %38 = arith.addf %36, %37 : vector<16x128xf32>
    %c0_28 = arith.constant 0 : index
    %c0_29 = arith.constant 0 : index
    %39 = vector.load %arg10[%c0_28, %c0_29] : memref<1x16xf32, #tpu.memory_space<vmem>>, vector<1x16xf32>
    %cst_30 = arith.constant dense<0.000000e+00> : vector<1x128xf32>
    %40 = tpu.matmul %39, %38, %cst_30 {dimension_numbers = #tpu.dot_dimension_numbers<[1], [0], [0], [1], [0, 0, 1, 1], [], []>} : vector<1x16xf32>, vector<16x128xf32>, vector<1x128xf32> -> vector<1x128xf32>
    %c0_31 = arith.constant 0 : index
    %c0_32 = arith.constant 0 : index
    %41 = vector.load %arg11[%c0_31, %c0_32] : memref<1x1xf32, #tpu.memory_space<vmem>>, vector<1x1xf32>
    %42 = vector.broadcast %41 : vector<1x1xf32> to vector<1x128xf32>
    %43 = arith.addf %40, %42 : vector<1x128xf32>
    %cst_33 = arith.constant 5.000000e-01 : f32
    %44 = vector.broadcast %cst_33 : f32 to vector<1x128xf32>
    %45 = arith.mulf %44, %43 : vector<1x128xf32>
    %46 = math.tanh %45 : vector<1x128xf32>
    %cst_34 = arith.constant 5.000000e-01 : f32
    %47 = vector.broadcast %cst_34 : f32 to vector<1x128xf32>
    %48 = arith.mulf %47, %46 : vector<1x128xf32>
    %cst_35 = arith.constant 5.000000e-01 : f32
    %49 = vector.broadcast %cst_35 : f32 to vector<1x128xf32>
    %50 = arith.addf %48, %49 : vector<1x128xf32>
    %c0_36 = arith.constant 0 : index
    %c0_37 = arith.constant 0 : index
    %51 = vector.load %arg12[%c0_36, %c0_37] : memref<1x128xf32, #tpu.memory_space<vmem>>, vector<1x128xf32>
    tpu.vector_store %arg12[%c0_36, %c0_37], %50 {strides = array<i32>} : memref<1x128xf32, #tpu.memory_space<vmem>>, vector<1x128xf32>,
    return
  }
  func.func @transform_0(%arg0: i32) -> (i32, i32) {
    %c0_i32 = arith.constant 0 : i32
    %c0_i32_0 = arith.constant 0 : i32
    return %c0_i32, %arg0 : i32, i32
  }
  func.func @transform_1(%arg0: i32) -> (i32, i32) {
    %c0_i32 = arith.constant 0 : i32
    %c0_i32_0 = arith.constant 0 : i32
    %c0_i32_1 = arith.constant 0 : i32
    return %c0_i32, %c0_i32_0 : i32, i32
  }
  func.func @transform_2(%arg0: i32) -> (i32, i32) {
    %c0_i32 = arith.constant 0 : i32
    %c0_i32_0 = arith.constant 0 : i32
    %c0_i32_1 = arith.constant 0 : i32
    return %c0_i32, %c0_i32_0 : i32, i32
  }
  func.func @transform_3(%arg0: i32) -> (i32, i32) {
    %c0_i32 = arith.constant 0 : i32
    %c0_i32_0 = arith.constant 0 : i32
    %c0_i32_1 = arith.constant 0 : i32
    return %c0_i32, %c0_i32_0 : i32, i32
  }
  func.func @transform_4(%arg0: i32) -> (i32, i32) {
    %c0_i32 = arith.constant 0 : i32
    %c0_i32_0 = arith.constant 0 : i32
    %c0_i32_1 = arith.constant 0 : i32
    return %c0_i32, %c0_i32_0 : i32, i32
  }
  func.func @transform_5(%arg0: i32) -> (i32, i32) {
    %c0_i32 = arith.constant 0 : i32
    %c0_i32_0 = arith.constant 0 : i32
    %c0_i32_1 = arith.constant 0 : i32
    return %c0_i32, %c0_i32_0 : i32, i32
  }
  func.func @transform_6(%arg0: i32) -> (i32, i32) {
    %c0_i32 = arith.constant 0 : i32
    %c0_i32_0 = arith.constant 0 : i32
    %c0_i32_1 = arith.constant 0 : i32
    return %c0_i32, %c0_i32_0 : i32, i32
  }
  func.func @transform_7(%arg0: i32) -> (i32, i32) {
    %c0_i32 = arith.constant 0 : i32
    %c0_i32_0 = arith.constant 0 : i32
    %c0_i32_1 = arith.constant 0 : i32
    return %c0_i32, %c0_i32_0 : i32, i32
  }
  func.func @transform_8(%arg0: i32) -> (i32, i32) {
    %c0_i32 = arith.constant 0 : i32
    %c0_i32_0 = arith.constant 0 : i32
    %c0_i32_1 = arith.constant 0 : i32
    return %c0_i32, %c0_i32_0 : i32, i32
  }
  func.func @transform_9(%arg0: i32) -> (i32, i32) {
    %c0_i32 = arith.constant 0 : i32
    %c0_i32_0 = arith.constant 0 : i32
    %c0_i32_1 = arith.constant 0 : i32
    return %c0_i32, %c0_i32_0 : i32, i32
  }
  func.func @transform_10(%arg0: i32) -> (i32, i32) {
    %c0_i32 = arith.constant 0 : i32
    %c0_i32_0 = arith.constant 0 : i32
    %c0_i32_1 = arith.constant 0 : i32
    return %c0_i32, %c0_i32_0 : i32, i32
  }
  func.func @transform_11(%arg0: i32) -> (i32, i32) {
    %c0_i32 = arith.constant 0 : i32
    %c0_i32_0 = arith.constant 0 : i32
    return %c0_i32, %arg0 : i32, i32
  }
}

</mosaic_0001>

<llo_original>
// kernel: tpu_custom_call.1
$region0: #{tpu_custom_call.1}
  #allocation0 [shape = 'u32[]', space=smem, size = 0x4, offset = 0x4, fixed_abs, tag = 'smem constant byte address 0x4 - core index']
  #allocation1 [shape = 'u32[72,128]{1,0:T(1,128)}', space=vmem, size = 0x9000, scoped, tag = 'internal scratch']
  #allocation2 [shape = 'f32[1,1]{1,0:T(1,128)S(1)}', space=vmem, size = 0x200, scoped, tag = 'scoped memory for tpu_custom_call.1']
  %s0 = inlined_call_operand.vmem [shape: f32[8,128], index: 0, kind: input, shape index: {}]
  %s1 = inlined_call_operand.vmem [shape: f32[96,8], index: 1, kind: input, shape index: {}]
  %s2 = inlined_call_operand.vmem [shape: f32[96,1], index: 2, kind: input, shape index: {}]
  %s3 = inlined_call_operand.vmem [shape: f32[64,96], index: 3, kind: input, shape index: {}]
  %s4 = inlined_call_operand.vmem [shape: f32[64,1], index: 4, kind: input, shape index: {}]
  %s5 = inlined_call_operand.vmem [shape: f32[32,64], index: 5, kind: input, shape index: {}]
  %s6 = inlined_call_operand.vmem [shape: f32[32,1], index: 6, kind: input, shape index: {}]
  %s7 = inlined_call_operand.vmem [shape: f32[16,32], index: 7, kind: input, shape index: {}]
  %s8 = inlined_call_operand.vmem [shape: f32[16,1], index: 8, kind: input, shape index: {}]
  %s9 = inlined_call_operand.vmem [shape: f32[1,16], index: 9, kind: input, shape index: {}]
  %s10 = inlined_call_operand.<no memory space> [shape: f32[1,1], index: 10, kind: input, shape index: {}]
  %s11 = inlined_call_operand.hbm [shape: f32[1,128], index: 11, kind: output, shape index: {}]
  %s12 = sld [smem:[#allocation0]]
  $region54: #{tpu_custom_call.1} parent=0
    _
  %s14 = ssub.s32 1, %s12
  %s15 = scalar_select 0, %s14, %s12
  %v16 = vstv %s10
  %17 = vst [vmem:[#allocation2] sm:$0x1] %v16
  $region1: #{tpu_custom_call.1} parent=0
    #allocation3 [shape = 'u8[512]{0}', space=vmem, size = 0x400, scoped, tag = 'output window, operand 0, single buffered']
    #allocation4 [shape = 's32[1]{0}', space=sflag, size = 0x4, scoped, tag = 'scoped memory for tpu_custom_call.1']
    %18 = vsyncpa [#allocation4], 0
    // Predicated region
    $region2: #{tpu_custom_call.1} parent=1 // pred_check
      _
    $region3: #{tpu_custom_call.1} parent=1 // pred_check_branch
      %20 = sbr.rel (0) target = $region5
    $region4: #{tpu_custom_call.1} parent=1 // pred_region
      _
    $region5: #{tpu_custom_call.1} parent=1 // pred_fallthru
      _
    // Predicated region
    $region6: #{tpu_custom_call.1} parent=1 // pred_check
      _
    $region7: #{tpu_custom_call.1} parent=1 // pred_check_branch
      %22 = sbr.rel (0) target = $region9
    $region8: #{tpu_custom_call.1} parent=1 // pred_region
      _
    $region9: #{tpu_custom_call.1} parent=1 // pred_fallthru
      _
    // Predicated region
    $region10: #{tpu_custom_call.1} parent=1 // pred_check
      _
    $region11: #{tpu_custom_call.1} parent=1 // pred_check_branch
      %24 = sbr.rel (0) target = $region13
    $region12: #{tpu_custom_call.1} parent=1 // pred_region
      _
    $region13: #{tpu_custom_call.1} parent=1 // pred_fallthru
      _
    // Predicated region
    $region14: #{tpu_custom_call.1} parent=1 // pred_check
      _
    $region15: #{tpu_custom_call.1} parent=1 // pred_check_branch
      %26 = sbr.rel (0) target = $region17
    $region16: #{tpu_custom_call.1} parent=1 // pred_region
      _
    $region17: #{tpu_custom_call.1} parent=1 // pred_fallthru
      _
    // Predicated region
    $region18: #{tpu_custom_call.1} parent=1 // pred_check
      _
    $region19: #{tpu_custom_call.1} parent=1 // pred_check_branch
      %28 = sbr.rel (0) target = $region21
    $region20: #{tpu_custom_call.1} parent=1 // pred_region
      _
    $region21: #{tpu_custom_call.1} parent=1 // pred_fallthru
      _
    // Predicated region
    $region22: #{tpu_custom_call.1} parent=1 // pred_check
      _
    $region23: #{tpu_custom_call.1} parent=1 // pred_check_branch
      %30 = sbr.rel (0) target = $region25
    $region24: #{tpu_custom_call.1} parent=1 // pred_region
      _
    $region25: #{tpu_custom_call.1} parent=1 // pred_fallthru
      _
    // Predicated region
    $region26: #{tpu_custom_call.1} parent=1 // pred_check
      _
    $region27: #{tpu_custom_call.1} parent=1 // pred_check_branch
      %32 = sbr.rel (0) target = $region29
    $region28: #{tpu_custom_call.1} parent=1 // pred_region
      _
    $region29: #{tpu_custom_call.1} parent=1 // pred_fallthru
      _
    // Predicated region
    $region30: #{tpu_custom_call.1} parent=1 // pred_check
      _
    $region31: #{tpu_custom_call.1} parent=1 // pred_check_branch
      %34 = sbr.rel (0) target = $region33
    $region32: #{tpu_custom_call.1} parent=1 // pred_region
      _
    $region33: #{tpu_custom_call.1} parent=1 // pred_fallthru
      _
    // Predicated region
    $region34: #{tpu_custom_call.1} parent=1 // pred_check
      _
    $region35: #{tpu_custom_call.1} parent=1 // pred_check_branch
      %36 = sbr.rel (0) target = $region37
    $region36: #{tpu_custom_call.1} parent=1 // pred_region
      _
    $region37: #{tpu_custom_call.1} parent=1 // pred_fallthru
      _
    // Predicated region
    $region38: #{tpu_custom_call.1} parent=1 // pred_check
      _
    $region39: #{tpu_custom_call.1} parent=1 // pred_check_branch
      %38 = sbr.rel (0) target = $region41
    $region40: #{tpu_custom_call.1} parent=1 // pred_region
      _
    $region41: #{tpu_custom_call.1} parent=1 // pred_fallthru
      _
    // Predicated region
    $region42: #{tpu_custom_call.1} parent=1 // pred_check
      _
    $region43: #{tpu_custom_call.1} parent=1 // pred_check_branch
      %40 = sbr.rel (0) target = $region45
    $region44: #{tpu_custom_call.1} parent=1 // pred_region
      _
    $region45: #{tpu_custom_call.1} parent=1 // pred_fallthru
      _
    %v41 = vld [vmem:[%s0] sm:$0xff]
    %v42 = vld [vmem:[%s1] sm:$0xff]
    %v43 = vld [vmem:[%s1 + $0x8] sm:$0xff]
    %v44 = vld [vmem:[%s1 + $0x10] sm:$0xff]
    %v45 = vld [vmem:[%s1 + $0x18] sm:$0xff]
    %v46 = vld [vmem:[%s1 + $0x20] sm:$0xff]
    %v47 = vld [vmem:[%s1 + $0x28] sm:$0xff]
    %v48 = vld [vmem:[%s1 + $0x30] sm:$0xff]
    %v49 = vld [vmem:[%s1 + $0x38] sm:$0xff]
    %v50 = vld [vmem:[%s1 + $0x40] sm:$0xff]
    %v51 = vld [vmem:[%s1 + $0x48] sm:$0xff]
    %v52 = vld [vmem:[%s1 + $0x50] sm:$0xff]
    %v53 = vld [vmem:[%s1 + $0x58] sm:$0xff]
    %v54 = vld [vmem:[%s2] sm:$0xff]
    %v55 = vld [vmem:[%s2 + $0x8] sm:$0xff]
    %v56 = vld [vmem:[%s2 + $0x10] sm:$0xff]
    %v57 = vld [vmem:[%s2 + $0x18] sm:$0xff]
    %v58 = vld [vmem:[%s2 + $0x20] sm:$0xff]
    %v59 = vld [vmem:[%s2 + $0x28] sm:$0xff]
    %v60 = vld [vmem:[%s2 + $0x30] sm:$0xff]
    %v61 = vld [vmem:[%s2 + $0x38] sm:$0xff]
    %v62 = vld [vmem:[%s2 + $0x40] sm:$0xff]
    %v63 = vld [vmem:[%s2 + $0x48] sm:$0xff]
    %v64 = vld [vmem:[%s2 + $0x50] sm:$0xff]
    %v65 = vld [vmem:[%s2 + $0x58] sm:$0xff]
    %67 = vset.pattern.permute.xlu0 0
    %68 = vperm.xlu0 %67, %v54
    %v69 = vpop.permute.xlu0 %68
    %72 = vset.pattern.permute.xlu0 0
    %73 = vperm.xlu0 %72, %v55
    %v74 = vpop.permute.xlu0 %73
    %77 = vset.pattern.permute.xlu0 0
    %78 = vperm.xlu0 %77, %v56
    %v79 = vpop.permute.xlu0 %78
    %82 = vset.pattern.permute.xlu0 0
    %83 = vperm.xlu0 %82, %v57
    %v84 = vpop.permute.xlu0 %83
    %87 = vset.pattern.permute.xlu0 0
    %88 = vperm.xlu0 %87, %v58
    %v89 = vpop.permute.xlu0 %88
    %92 = vset.pattern.permute.xlu0 0
    %93 = vperm.xlu0 %92, %v59
    %v94 = vpop.permute.xlu0 %93
    %97 = vset.pattern.permute.xlu0 0
    %98 = vperm.xlu0 %97, %v60
    %v99 = vpop.permute.xlu0 %98
    %102 = vset.pattern.permute.xlu0 0
    %103 = vperm.xlu0 %102, %v61
    %v104 = vpop.permute.xlu0 %103
    %107 = vset.pattern.permute.xlu0 0
    %108 = vperm.xlu0 %107, %v62
    %v109 = vpop.permute.xlu0 %108
    %112 = vset.pattern.permute.xlu0 0
    %113 = vperm.xlu0 %112, %v63
    %v114 = vpop.permute.xlu0 %113
    %117 = vset.pattern.permute.xlu0 0
    %118 = vperm.xlu0 %117, %v64
    %v119 = vpop.permute.xlu0 %118
    %122 = vset.pattern.permute.xlu0 0
    %123 = vperm.xlu0 %122, %v65
    %v124 = vpop.permute.xlu0 %123
    %vm126 = vcmask 64512
    %v128 = vsel %vm126, %v42, 0
    %v131 = vsel %vm126, %v43, 0
    %v134 = vsel %vm126, %v44, 0
    %v137 = vsel %vm126, %v45, 0
    %v140 = vsel %vm126, %v46, 0
    %v143 = vsel %vm126, %v47, 0
    %v146 = vsel %vm126, %v48, 0
    %v149 = vsel %vm126, %v49, 0
    %v152 = vsel %vm126, %v50, 0
    %v155 = vsel %vm126, %v51, 0
    %v158 = vsel %vm126, %v52, 0
    %v161 = vsel %vm126, %v53, 0
    %163 = vmatpush.msra.mxu0 0.0
    %164 = vmatpush.msra.mxu0 0.0
    %165 = vmatpush.msra.mxu0 0.0
    %166 = vmatpush.msra.mxu0 0.0
    %167 = vmatpush.msra.mxu0 0.0
    %168 = vmatpush.msra.mxu0 0.0
    %169 = vmatpush.msra.mxu0 0.0
    %170 = vmatpush.msra.mxu0 0.0
    %171 = vmatpush.msra.mxu0 0.0
    %172 = vmatpush.msra.mxu0 0.0
    %173 = vmatpush.msra.mxu0 0.0
    %174 = vmatpush.msra.mxu0 0.0
    %175 = vmatpush.msra.mxu0 0.0
    %176 = vmatpush.msra.mxu0 0.0
    %177 = vmatpush.msra.mxu0 0.0
    %178 = vmatpush.msra.mxu0 %v41
    %179 = vmatmul.f32.gmra.mxu0 %v128
    %v180 = vpop.f32.mrf.mxu0
    %v181 = vadd.f32 %v69, %v180
    %182 = vmatmul.f32.gmra.mxu0 %v131
    %v183 = vpop.f32.mrf.mxu0
    %v184 = vadd.f32 %v74, %v183
    %185 = vmatmul.f32.gmra.mxu0 %v134
    %v186 = vpop.f32.mrf.mxu0
    %v187 = vadd.f32 %v79, %v186
    %188 = vmatmul.f32.gmra.mxu0 %v137
    %v189 = vpop.f32.mrf.mxu0
    %v190 = vadd.f32 %v84, %v189
    %191 = vmatmul.f32.gmra.mxu0 %v140
    %v192 = vpop.f32.mrf.mxu0
    %v193 = vadd.f32 %v89, %v192
    %194 = vmatmul.f32.gmra.mxu0 %v143
    %v195 = vpop.f32.mrf.mxu0
    %v196 = vadd.f32 %v94, %v195
    %197 = vmatmul.f32.gmra.mxu0 %v146
    %v198 = vpop.f32.mrf.mxu0
    %v199 = vadd.f32 %v99, %v198
    %200 = vmatmul.f32.gmra.mxu0 %v149
    %v201 = vpop.f32.mrf.mxu0
    %v202 = vadd.f32 %v104, %v201
    %203 = vmatmul.f32.gmra.mxu0 %v152
    %v204 = vpop.f32.mrf.mxu0
    %v205 = vadd.f32 %v109, %v204
    %206 = vmatmul.f32.gmra.mxu0 %v155
    %v207 = vpop.f32.mrf.mxu0
    %v208 = vadd.f32 %v114, %v207
    %209 = vmatmul.f32.gmra.mxu0 %v158
    %v210 = vpop.f32.mrf.mxu0
    %v211 = vadd.f32 %v119, %v210
    %212 = vmatmul.f32.gmra.mxu0 %v161
    %v213 = vpop.f32.mrf.mxu0
    %v214 = vadd.f32 %v124, %v213
    %215 = vdwg.mxu0
    %v216 = vmax.f32 %v181, 0.0
    %v217 = vmax.f32 %v184, 0.0
    %v218 = vmax.f32 %v187, 0.0
    %v219 = vmax.f32 %v190, 0.0
    %v220 = vmax.f32 %v193, 0.0
    %v221 = vmax.f32 %v196, 0.0
    %v222 = vmax.f32 %v199, 0.0
    %v223 = vmax.f32 %v202, 0.0
    %v224 = vmax.f32 %v205, 0.0
    %v225 = vmax.f32 %v208, 0.0
    %v226 = vmax.f32 %v211, 0.0
    %v227 = vmax.f32 %v214, 0.0
    %v228 = vld [vmem:[%s3] sm:$0xff]
    %v229 = vld [vmem:[%s3 + $0x8] sm:$0xff]
    %v230 = vld [vmem:[%s3 + $0x10] sm:$0xff]
    %v231 = vld [vmem:[%s3 + $0x18] sm:$0xff]
    %v232 = vld [vmem:[%s3 + $0x20] sm:$0xff]
    %v233 = vld [vmem:[%s3 + $0x28] sm:$0xff]
    %v234 = vld [vmem:[%s3 + $0x30] sm:$0xff]
    %v235 = vld [vmem:[%s3 + $0x38] sm:$0xff]
    %v236 = vld [vmem:[%s4] sm:$0xff]
    %v237 = vld [vmem:[%s4 + $0x8] sm:$0xff]
    %v238 = vld [vmem:[%s4 + $0x10] sm:$0xff]
    %v239 = vld [vmem:[%s4 + $0x18] sm:$0xff]
    %v240 = vld [vmem:[%s4 + $0x20] sm:$0xff]
    %v241 = vld [vmem:[%s4 + $0x28] sm:$0xff]
    %v242 = vld [vmem:[%s4 + $0x30] sm:$0xff]
    %v243 = vld [vmem:[%s4 + $0x38] sm:$0xff]
    %245 = vset.pattern.permute.xlu0 0
    %246 = vperm.xlu0 %245, %v236
    %v247 = vpop.permute.xlu0 %246
    %250 = vset.pattern.permute.xlu0 0
    %251 = vperm.xlu0 %250, %v237
    %v252 = vpop.permute.xlu0 %251
    %255 = vset.pattern.permute.xlu0 0
    %256 = vperm.xlu0 %255, %v238
    %v257 = vpop.permute.xlu0 %256
    %260 = vset.pattern.permute.xlu0 0
    %261 = vperm.xlu0 %260, %v239
    %v262 = vpop.permute.xlu0 %261
    %265 = vset.pattern.permute.xlu0 0
    %266 = vperm.xlu0 %265, %v240
    %v267 = vpop.permute.xlu0 %266
    %270 = vset.pattern.permute.xlu0 0
    %271 = vperm.xlu0 %270, %v241
    %v272 = vpop.permute.xlu0 %271
    %275 = vset.pattern.permute.xlu0 0
    %276 = vperm.xlu0 %275, %v242
    %v277 = vpop.permute.xlu0 %276
    %280 = vset.pattern.permute.xlu0 0
    %281 = vperm.xlu0 %280, %v243
    %v282 = vpop.permute.xlu0 %281
    %vm284 = vcmask 785408
    %v286 = vsel %vm284, %v228, 0
    %v289 = vsel %vm284, %v229, 0
    %v292 = vsel %vm284, %v230, 0
    %v295 = vsel %vm284, %v231, 0
    %v298 = vsel %vm284, %v232, 0
    %v301 = vsel %vm284, %v233, 0
    %v304 = vsel %vm284, %v234, 0
    %v307 = vsel %vm284, %v235, 0
    %309 = vmatpush.msra.mxu0 0.0
    %310 = vmatpush.msra.mxu0 0.0
    %311 = vmatpush.msra.mxu0 0.0
    %312 = vmatpush.msra.mxu0 0.0
    %313 = vmatpush.msra.mxu0 %v227
    %314 = vmatpush.msra.mxu0 %v226
    %315 = vmatpush.msra.mxu0 %v225
    %316 = vmatpush.msra.mxu0 %v224
    %317 = vmatpush.msra.mxu0 %v223
    %318 = vmatpush.msra.mxu0 %v222
    %319 = vmatpush.msra.mxu0 %v221
    %320 = vmatpush.msra.mxu0 %v220
    %321 = vmatpush.msra.mxu0 %v219
    %322 = vmatpush.msra.mxu0 %v218
    %323 = vmatpush.msra.mxu0 %v217
    %324 = vmatpush.msra.mxu0 %v216
    %325 = vmatmul.f32.gmra.mxu0 %v286
    %v326 = vpop.f32.mrf.mxu0
    %v327 = vadd.f32 %v247, %v326
    %328 = vmatmul.f32.gmra.mxu0 %v289
    %v329 = vpop.f32.mrf.mxu0
    %v330 = vadd.f32 %v252, %v329
    %331 = vmatmul.f32.gmra.mxu0 %v292
    %v332 = vpop.f32.mrf.mxu0
    %v333 = vadd.f32 %v257, %v332
    %334 = vmatmul.f32.gmra.mxu0 %v295
    %v335 = vpop.f32.mrf.mxu0
    %v336 = vadd.f32 %v262, %v335
    %337 = vmatmul.f32.gmra.mxu0 %v298
    %v338 = vpop.f32.mrf.mxu0
    %v339 = vadd.f32 %v267, %v338
    %340 = vmatmul.f32.gmra.mxu0 %v301
    %v341 = vpop.f32.mrf.mxu0
    %v342 = vadd.f32 %v272, %v341
    %343 = vmatmul.f32.gmra.mxu0 %v304
    %v344 = vpop.f32.mrf.mxu0
    %v345 = vadd.f32 %v277, %v344
    %346 = vmatmul.f32.gmra.mxu0 %v307
    %v347 = vpop.f32.mrf.mxu0
    %v348 = vadd.f32 %v282, %v347
    %349 = vdwg.mxu0
    %v350 = vmax.f32 %v327, 0.0
    %v351 = vmax.f32 %v330, 0.0
    %v352 = vmax.f32 %v333, 0.0
    %v353 = vmax.f32 %v336, 0.0
    %v354 = vmax.f32 %v339, 0.0
    %v355 = vmax.f32 %v342, 0.0
    %v356 = vmax.f32 %v345, 0.0
    %v357 = vmax.f32 %v348, 0.0
    %v358 = vld [vmem:[%s5] sm:$0xff]
    %v359 = vld [vmem:[%s5 + $0x8] sm:$0xff]
    %v360 = vld [vmem:[%s5 + $0x10] sm:$0xff]
    %v361 = vld [vmem:[%s5 + $0x18] sm:$0xff]
    %v362 = vld [vmem:[%s6] sm:$0xff]
    %v363 = vld [vmem:[%s6 + $0x8] sm:$0xff]
    %v364 = vld [vmem:[%s6 + $0x10] sm:$0xff]
    %v365 = vld [vmem:[%s6 + $0x18] sm:$0xff]
    %367 = vset.pattern.permute.xlu0 0
    %368 = vperm.xlu0 %367, %v362
    %v369 = vpop.permute.xlu0 %368
    %372 = vset.pattern.permute.xlu0 0
    %373 = vperm.xlu0 %372, %v363
    %v374 = vpop.permute.xlu0 %373
    %377 = vset.pattern.permute.xlu0 0
    %378 = vperm.xlu0 %377, %v364
    %v379 = vpop.permute.xlu0 %378
    %382 = vset.pattern.permute.xlu0 0
    %383 = vperm.xlu0 %382, %v365
    %v384 = vpop.permute.xlu0 %383
    %vm386 = vcmask 523264
    %v388 = vsel %vm386, %v358, 0
    %v391 = vsel %vm386, %v359, 0
    %v394 = vsel %vm386, %v360, 0
    %v397 = vsel %vm386, %v361, 0
    %399 = vmatpush.msra.mxu0 0.0
    %400 = vmatpush.msra.mxu0 0.0
    %401 = vmatpush.msra.mxu0 0.0
    %402 = vmatpush.msra.mxu0 0.0
    %403 = vmatpush.msra.mxu0 0.0
    %404 = vmatpush.msra.mxu0 0.0
    %405 = vmatpush.msra.mxu0 0.0
    %406 = vmatpush.msra.mxu0 0.0
    %407 = vmatpush.msra.mxu0 %v357
    %408 = vmatpush.msra.mxu0 %v356
    %409 = vmatpush.msra.mxu0 %v355
    %410 = vmatpush.msra.mxu0 %v354
    %411 = vmatpush.msra.mxu0 %v353
    %412 = vmatpush.msra.mxu0 %v352
    %413 = vmatpush.msra.mxu0 %v351
    %414 = vmatpush.msra.mxu0 %v350
    %415 = vmatmul.f32.gmra.mxu0 %v388
    %v416 = vpop.f32.mrf.mxu0
    %v417 = vadd.f32 %v369, %v416
    %418 = vmatmul.f32.gmra.mxu0 %v391
    %v419 = vpop.f32.mrf.mxu0
    %v420 = vadd.f32 %v374, %v419
    %421 = vmatmul.f32.gmra.mxu0 %v394
    %v422 = vpop.f32.mrf.mxu0
    %v423 = vadd.f32 %v379, %v422
    %424 = vmatmul.f32.gmra.mxu0 %v397
    %v425 = vpop.f32.mrf.mxu0
    %v426 = vadd.f32 %v384, %v425
    %427 = vdwg.mxu0
    %v428 = vmul.f32 %v417, 0.5
    %v429 = vmul.f32 %v420, 0.5
    %v430 = vmul.f32 %v423, 0.5
    %v431 = vmul.f32 %v426, 0.5
    %v432 = vtanh.pop %v428
    %v433 = vtanh.pop %v429
    %v434 = vtanh.pop %v430
    %v435 = vtanh.pop %v431
    %v436 = vmul.f32 %v432, 0.5
    %v437 = vmul.f32 %v433, 0.5
    %v438 = vmul.f32 %v434, 0.5
    %v439 = vmul.f32 %v435, 0.5
    %v440 = vadd.f32 %v436, 0.5
    %v441 = vadd.f32 %v437, 0.5
    %v442 = vadd.f32 %v438, 0.5
    %v443 = vadd.f32 %v439, 0.5
    %v444 = vld [vmem:[%s7] sm:$0xff]
    %v445 = vld [vmem:[%s7 + $0x8] sm:$0xff]
    %v446 = vld [vmem:[%s8] sm:$0xff]
    %v447 = vld [vmem:[%s8 + $0x8] sm:$0xff]
    %449 = vset.pattern.permute.xlu0 0
    %450 = vperm.xlu0 %449, %v446
    %v451 = vpop.permute.xlu0 %450
    %454 = vset.pattern.permute.xlu0 0
    %455 = vperm.xlu0 %454, %v447
    %v456 = vpop.permute.xlu0 %455
    %vm458 = vcmask 261120
    %v460 = vsel %vm458, %v444, 0
    %v463 = vsel %vm458, %v445, 0
    %465 = vmatpush.msra.mxu0 0.0
    %466 = vmatpush.msra.mxu0 0.0
    %467 = vmatpush.msra.mxu0 0.0
    %468 = vmatpush.msra.mxu0 0.0
    %469 = vmatpush.msra.mxu0 0.0
    %470 = vmatpush.msra.mxu0 0.0
    %471 = vmatpush.msra.mxu0 0.0
    %472 = vmatpush.msra.mxu0 0.0
    %473 = vmatpush.msra.mxu0 0.0
    %474 = vmatpush.msra.mxu0 0.0
    %475 = vmatpush.msra.mxu0 0.0
    %476 = vmatpush.msra.mxu0 0.0
    %477 = vmatpush.msra.mxu0 %v443
    %478 = vmatpush.msra.mxu0 %v442
    %479 = vmatpush.msra.mxu0 %v441
    %480 = vmatpush.msra.mxu0 %v440
    %481 = vmatmul.f32.gmra.mxu0 %v460
    %v482 = vpop.f32.mrf.mxu0
    %v483 = vadd.f32 %v451, %v482
    %484 = vmatmul.f32.gmra.mxu0 %v463
    %v485 = vpop.f32.mrf.mxu0
    %v486 = vadd.f32 %v456, %v485
    %487 = vdwg.mxu0
    %v488 = vmul.f32 %v483, 0.5
    %v489 = vmul.f32 %v486, 0.5
    %v490 = vtanh.pop %v488
    %v491 = vtanh.pop %v489
    %v492 = vmul.f32 %v490, 0.5
    %v493 = vmul.f32 %v491, 0.5
    %v494 = vadd.f32 %v492, 0.5
    %v495 = vadd.f32 %v493, 0.5
    %v496 = vld [vmem:[%s9] sm:$0x1]
    %v497 = vld [vmem:[#allocation2] sm:$0x1]
    %499 = vset.pattern.permute.xlu0 0
    %500 = vperm.xlu0 %499, %v497
    %v501 = vpop.permute.xlu0 %500
    %v503 = vperm.slane %v501, 0
    %vm504 = vcmask 130048
    %v506 = vsel %vm504, %v496, 0
    %508 = vmatpush.msra.mxu0 0.0
    %509 = vmatpush.msra.mxu0 0.0
    %510 = vmatpush.msra.mxu0 0.0
    %511 = vmatpush.msra.mxu0 0.0
    %512 = vmatpush.msra.mxu0 0.0
    %513 = vmatpush.msra.mxu0 0.0
    %514 = vmatpush.msra.mxu0 0.0
    %515 = vmatpush.msra.mxu0 0.0
    %516 = vmatpush.msra.mxu0 0.0
    %517 = vmatpush.msra.mxu0 0.0
    %518 = vmatpush.msra.mxu0 0.0
    %519 = vmatpush.msra.mxu0 0.0
    %520 = vmatpush.msra.mxu0 0.0
    %521 = vmatpush.msra.mxu0 0.0
    %522 = vmatpush.msra.mxu0 %v495
    %523 = vmatpush.msra.mxu0 %v494
    %524 = vmatmul.f32.gmra.mxu0 %v506
    %v525 = vpop.f32.mrf.mxu0
    %v526 = vadd.f32 %v503, %v525
    %527 = vdwg.mxu0
    %v528 = vmul.f32 %v526, 0.5
    %v529 = vtanh.pop %v528
    %v530 = vmul.f32 %v529, 0.5
    %v531 = vadd.f32 %v530, 0.5
    %532 = vst [vmem:[#allocation3] sm:$0x1] %v531
    // Predicated region
    $region46: #{tpu_custom_call.1} parent=1 // pred_check
      _
    $region47: #{tpu_custom_call.1} parent=1 // pred_check_branch
      %534 = sbr.rel (0) target = $region49
    $region48: #{tpu_custom_call.1} parent=1 // pred_region
      %536 = vsyncadd [#allocation4], 0
      %s538 = sshll.u32 [#allocation3], 4
      %s539 = int_to_ptr.vmem [resolvable:$true] %s538
      %s540 = sshll.u32 %s11, 4
      %s541 = int_to_ptr.hbm [resolvable:$true] %s540
      %543 = dma.vmem_to_hbm [thread:$0]  %s539, 16, %s541, [#allocation4]
    $region49: #{tpu_custom_call.1} parent=1 // pred_fallthru
      _
    // Predicated region
    $region50: #{tpu_custom_call.1} parent=1 // pred_check
      _
    $region51: #{tpu_custom_call.1} parent=1 // pred_check_branch
      %545 = sbr.rel (0) target = $region53
    $region52: #{tpu_custom_call.1} parent=1 // pred_region
      %547 = dma.done [#allocation4], 16
    $region53: #{tpu_custom_call.1} parent=1 // pred_fallthru
      _
    %548 = vsyncpa [#allocation4], 1

</llo_original>
